<compile_context>
chip_gen: v6e
topology: v6e:2x2x1
jax: 0.10.0
libtpu: 0.0.40
codegen_flags: <defaults>
</compile_context>

<pallas_src>
import functools

import jax
import jax.numpy as jnp
from jax import lax
from jax.experimental import pallas as pl
from jax.experimental.pallas import tpu as pltpu

_LANE = 128      # lane tile width
_SUB = 8         # sublane tile height
_ACC_ROWS = 64   # accumulator bank: 8 independent vregs -> ILP for the VALUs


def _accumulate(acc_ref, dsq, tile_rows):
    """Add a (tile_rows, 128) squared-diff block into the accumulator bank."""
    if tile_rows % _ACC_ROWS == 0:
        # 8 independent (8,128) vreg accumulators: per-step add tree keeps the
        # 4 VALU slots busy (no serial 511-add chain), hidden under DMA.
        acc_ref[...] += jnp.sum(
            dsq.reshape(tile_rows // _ACC_ROWS, _ACC_ROWS, _LANE), axis=0)
    elif tile_rows % _SUB == 0:
        acc_ref[0:_SUB, :] += jnp.sum(
            dsq.reshape(tile_rows // _SUB, _SUB, _LANE), axis=0)
    else:
        # Tiny slab (< 8 rows, single block): accumulate into row 0.
        acc_ref[0:1, :] += jnp.sum(dsq, axis=0, keepdims=True)


def _mse_kernel(sr_ref, hr_ref, out_ref, acc_ref, *,
                valid_rows, tile_rows, total_tiles, tiles_per_part,
                has_partial_last, has_overflow):
    """Accumulate sum((sr - hr)^2) over one (tile_rows, 128) block."""
    p = pl.program_id(0)             # parallel part (one per TC on v7x)
    i = pl.program_id(1)             # sequential reduction step in the part
    blk = p * tiles_per_part + i     # logical block index

    @pl.when(i == 0)
    def _():
        acc_ref[...] = jnp.zeros_like(acc_ref)

    # Upcast in-register: HBM streams the original dtype (bf16 -> half bytes).
    d = sr_ref[...].astype(jnp.float32) - hr_ref[...].astype(jnp.float32)
    dsq = d * d
    # TODO(synk): on v7x/bf16 the row reduction could be offloaded to the idle
    # MXU via a ones((8, tile_rows)) @ dsq matmul; kept on the VPU here.

    if has_partial_last:
        # Hot path: every full block -- no mask ops at all.
        @pl.when(blk < total_tiles - 1)
        def _():
            _accumulate(acc_ref, dsq, tile_rows)

        # Cold path (runs once per kernel): the partial last block.  Rows past
        # the true end hold DMA garbage (possibly NaN/Inf) -- zeroed by the
        # select built from a narrow (tile_rows, 1) iota.
        @pl.when(blk == total_tiles - 1)
        def _():
            row_start = (total_tiles - 1) * tile_rows
            row_ids = row_start + lax.broadcasted_iota(
                jnp.int32, (tile_rows, 1), 0)
            _accumulate(acc_ref,
                        jnp.where(row_ids < valid_rows, dsq, 0.0),
                        tile_rows)
        # Overflow blocks (blk >= total_tiles) fall through both whens.
    elif has_overflow:
        @pl.when(blk < total_tiles)
        def _():
            _accumulate(acc_ref, dsq, tile_rows)
    else:
        _accumulate(acc_ref, dsq, tile_rows)

    @pl.when(i == pl.num_programs(1) - 1)
    def _():
        out_ref[0, 0] = jnp.sum(acc_ref[...])


def _is_v7x():
    try:
        kind = jax.devices()[0].device_kind.lower()
    except Exception:
        kind = ""
    return ("v7" in kind) or ("7x" in kind)


def perceptual_loss(sr, hr, *, tile_rows=None, num_parts=None):
    """F.mse_loss(sr, hr): mean((sr - hr)^2) over all elements (f32 scalar)."""
    assert sr.shape == hr.shape, "mse_loss requires equal shapes"
    n_elems = int(sr.size)
    assert n_elems > 0

    is_v7 = _is_v7x()
    itemsize = jnp.dtype(sr.dtype).itemsize

    if tile_rows is None:
        # Bigger steps on v7x (~2.4x HBM BW/TC) so the ~0.35us/step grid
        # overhead stays <10%; ~4 MiB per input per buffer either way.
        tile_rows = (16384 if itemsize <= 2 else 8192) if is_v7 else 4096
    if num_parts is None:
        # Only v7x has 2 TensorCores per chip; on 1-TC chips a >1 split only
        # risks an uneven-split overflow step with zero upside.
        num_parts = 2 if is_v7 else 1

    # Flatten (layout-compatible, no copy).  Keep the original dtype.
    sr_f = sr.reshape(-1)
    hr_f = hr.reshape(-1)

    # Rare corner case: element count not lane-aligned -> pad <=127 zeros
    # (zeros contribute 0 to the squared-diff sum).  Never triggered for
    # typical feature maps.
    # TODO(synk): replace this jnp.pad (full HBM copy when it fires) with an
    # in-kernel lane mask on the final block.
    lane_pad = (-n_elems) % _LANE
    if lane_pad:
        sr_f = jnp.pad(sr_f, (0, lane_pad))
        hr_f = jnp.pad(hr_f, (0, lane_pad))

    rows = (n_elems + lane_pad) // _LANE
    sr2 = sr_f.reshape(rows, _LANE)   # free reshape (last dim = lane width)
    hr2 = hr_f.reshape(rows, _LANE)

    # Tile sizing: multiple of 8 sublanes, never larger than the slab.
    tile_rows = max(_SUB, (int(tile_rows) // _SUB) * _SUB)
    if rows < _SUB:
        tile_rows = rows                       # full-dim block for tiny inputs
    else:
        tile_rows = min(tile_rows, (rows // _SUB) * _SUB)

    total_tiles = pl.cdiv(rows, tile_rows)

    # Part split: every part must own at least one real block.
    num_parts = max(1, min(int(num_parts), total_tiles))
    while (num_parts > 1 and
           (num_parts - 1) * pl.cdiv(total_tiles, num_parts) >= total_tiles):
        num_parts -= 1
    tiles_per_part = pl.cdiv(total_tiles, num_parts)

    has_partial_last = (rows % tile_rows) != 0
    has_overflow = (num_parts * tiles_per_part) != total_tiles

    def in_map(p, i):
        # Overflow steps (only possible in the last part) map onto the SAME
        # block as the previous step of that part, so the pipeline skips the
        # re-fetch; their compute is skipped in-kernel.
        last_valid_i = jnp.minimum(tiles_per_part - 1,
                                   total_tiles - 1 - p * tiles_per_part)
        return (p * tiles_per_part + jnp.minimum(i, last_valid_i), 0)

    kernel = functools.partial(
        _mse_kernel,
        valid_rows=rows,
        tile_rows=tile_rows,
        total_tiles=total_tiles,
        tiles_per_part=tiles_per_part,
        has_partial_last=has_partial_last,
        has_overflow=has_overflow,
    )

    # 3-deep input pipeline on v7x absorbs DMA-issue jitter at ~1us steps.
    num_buffers = 3 if (is_v7 and tiles_per_part > 1) else 2
    spec_kwargs = {}
    if num_buffers != 2:
        spec_kwargs["pipeline_mode"] = pl.Buffered(num_buffers)
    in_specs = [pl.BlockSpec((tile_rows, _LANE), in_map, **spec_kwargs),
                pl.BlockSpec((tile_rows, _LANE), in_map, **spec_kwargs)]

    # VMEM limit from the actual footprint (+50% and a fixed margin) instead
    # of a blanket 48 MiB: leaves headroom on v7x's 64 MiB/TC and fails fast
    # at compile time if tile sizing is pushed too far.
    tile_bytes = tile_rows * _LANE * itemsize
    footprint = 2 * num_buffers * tile_bytes + _ACC_ROWS * _LANE * 4
    vmem_limit = min(max(int(footprint * 1.5) + (8 << 20), 16 << 20), 60 << 20)

    partial_sums = pl.pallas_call(
        kernel,
        out_shape=jax.ShapeDtypeStruct((num_parts, 1), jnp.float32),
        grid_spec=pltpu.PrefetchScalarGridSpec(
            num_scalar_prefetch=0,
            grid=(num_parts, tiles_per_part),
            in_specs=in_specs,
            out_specs=pl.BlockSpec((1, 1), lambda p, i: (p, 0),
                                   memory_space=pltpu.SMEM),
            scratch_shapes=[pltpu.VMEM((_ACC_ROWS, _LANE), jnp.float32)],
        ),
        compiler_params=pltpu.CompilerParams(
            dimension_semantics=("parallel", "arbitrary"),
            vmem_limit_bytes=vmem_limit,
        ),
    )(sr2, hr2)

    return jnp.sum(partial_sums) / n_elems


if __name__ == "__main__":
    key = jax.random.PRNGKey(0)
    k1, k2, k3, k4 = jax.random.split(key, 4)

    # relu5_1-style feature maps (small synthetic shapes), NCHW like PyTorch.
    sr_relu5_1 = jax.random.normal(k1, (2, 4, 16, 16), dtype=jnp.float32)
    hr_relu5_1 = jax.random.normal(k2, (2, 4, 16, 16), dtype=jnp.float32)

    loss = jax.block_until_ready(perceptual_loss(sr_relu5_1, hr_relu5_1))
    ref = jnp.mean((sr_relu5_1 - hr_relu5_1) ** 2)
    assert jnp.allclose(loss, ref, rtol=1e-5, atol=1e-6), (loss, ref)

    # Partial last block: 17 row-tiles of 128 lanes -> masked cold path only
    # on the final block (hot path stays unmasked).
    a = jax.random.normal(k3, (2, 4, 16, 17), dtype=jnp.float32)
    b = jax.random.normal(k4, (2, 4, 16, 17), dtype=jnp.float32)
    ref2 = jnp.mean((a - b) ** 2)
    loss2 = jax.block_until_ready(perceptual_loss(a, b, tile_rows=16))
    assert jnp.allclose(loss2, ref2, rtol=1e-5, atol=1e-6), (loss2, ref2)

    # Uneven split across the parallel axis: the overflow step reuses (does
    # not re-fetch) its predecessor's block and its compute is skipped.
    loss3 = jax.block_until_ready(
        perceptual_loss(a, b, tile_rows=8, num_parts=2))
    assert jnp.allclose(loss3, ref2, rtol=1e-5, atol=1e-6), (loss3, ref2)

    # bf16 streaming (upcast happens in-register inside the kernel).
    a16 = a.astype(jnp.bfloat16)
    b16 = b.astype(jnp.bfloat16)
    ref4 = jnp.mean((a16.astype(jnp.float32) - b16.astype(jnp.float32)) ** 2)
    loss4 = jax.block_until_ready(perceptual_loss(a16, b16))
    assert jnp.allclose(loss4, ref4, rtol=1e-5, atol=1e-6), (loss4, ref4)

    # Lane-unaligned element count (rare corner): zero-pad branch.
    c = jax.random.normal(k1, (3, 5, 7), dtype=jnp.float32)
    d = jax.random.normal(k2, (3, 5, 7), dtype=jnp.float32)
    ref5 = jnp.mean((c - d) ** 2)
    loss5 = jax.block_until_ready(perceptual_loss(c, d))
    assert jnp.allclose(loss5, ref5, rtol=1e-5, atol=1e-6), (loss5, ref5)

    print("KERNEL_OK")
</pallas_src>

<mosaic_0001>
module attributes {stable_mosaic.version = 11 : i64} {
  func.func @_mse_kernel(%arg0: i32, %arg1: i32, %arg2: memref<16x128xf32, #tpu.memory_space<vmem>>, %arg3: memref<16x128xf32, #tpu.memory_space<vmem>>, %arg4: memref<1x1xf32, #tpu.memory_space<smem>>, %arg5: memref<64x128xf32, #tpu.memory_space<vmem>>) attributes {dimension_semantics = [#tpu.dimension_semantics<parallel>, #tpu.dimension_semantics<arbitrary>], iteration_bounds = array<i64: 1, 1>, scalar_prefetch = 0 : i64, scratch_operands = 1 : i64, tpu.core_type = #tpu.core_type<tc>, window_params = [{transform_indices = @transform_0, window_bounds = array<i64: 16, 128>}, {transform_indices = @transform_1, window_bounds = array<i64: 16, 128>}, {transform_indices = @transform_2, window_bounds = array<i64: 1, 1>}]} {
    %c0_i32 = arith.constant 0 : i32
    %0 = arith.cmpi eq, %arg1, %c0_i32 : i32
    %1 = arith.extui %0 : i1 to i32
    %c0_i32_0 = arith.constant 0 : i32
    %2 = arith.cmpi ne, %1, %c0_i32_0 : i32
    scf.if %2 {
      %cst_10 = arith.constant 0.000000e+00 : f32
      %15 = vector.broadcast %cst_10 : f32 to vector<64x128xf32>
      %c0_11 = arith.constant 0 : index
      %c0_12 = arith.constant 0 : index
      %16 = vector.load %arg5[%c0_11, %c0_12] : memref<64x128xf32, #tpu.memory_space<vmem>>, vector<64x128xf32>
      tpu.vector_store %arg5[%c0_11, %c0_12], %15 {strides = array<i32>} : memref<64x128xf32, #tpu.memory_space<vmem>>, vector<64x128xf32>,
    } else {
    }
    %c0 = arith.constant 0 : index
    %c0_1 = arith.constant 0 : index
    %3 = vector.load %arg2[%c0, %c0_1] : memref<16x128xf32, #tpu.memory_space<vmem>>, vector<16x128xf32>
    %c0_2 = arith.constant 0 : index
    %c0_3 = arith.constant 0 : index
    %4 = vector.load %arg3[%c0_2, %c0_3] : memref<16x128xf32, #tpu.memory_space<vmem>>, vector<16x128xf32>
    %5 = arith.subf %3, %4 : vector<16x128xf32>
    %6 = arith.mulf %5, %5 : vector<16x128xf32>
    %c0_4 = arith.constant 0 : index
    %c0_5 = arith.constant 0 : index
    %7 = vector.load %arg5[%c0_4, %c0_5] : memref<64x128xf32, #tpu.memory_space<vmem>>, vector<8x128xf32>
    %8 = vector.shape_cast %6 : vector<16x128xf32> to vector<2x8x128xf32>
    %cst = arith.constant dense<0.000000e+00> : vector<8x128xf32>
    %9 = vector.multi_reduction <add>, %8, %cst [0] : vector<2x8x128xf32> to vector<8x128xf32>
    %10 = arith.addf %7, %9 : vector<8x128xf32>
    %c0_6 = arith.constant 0 : index
    %c0_7 = arith.constant 0 : index
    %11 = vector.load %arg5[%c0_6, %c0_7] : memref<64x128xf32, #tpu.memory_space<vmem>>, vector<8x128xf32>
    tpu.vector_store %arg5[%c0_6, %c0_7], %10 {strides = array<i32>} : memref<64x128xf32, #tpu.memory_space<vmem>>, vector<8x128xf32>,
    %c0_i32_8 = arith.constant 0 : i32
    %12 = arith.cmpi eq, %arg1, %c0_i32_8 : i32
    %13 = arith.extui %12 : i1 to i32
    %c0_i32_9 = arith.constant 0 : i32
    %14 = arith.cmpi ne, %13, %c0_i32_9 : i32
    scf.if %14 {
      %c0_10 = arith.constant 0 : index
      %c0_11 = arith.constant 0 : index
      %15 = vector.load %arg5[%c0_10, %c0_11] : memref<64x128xf32, #tpu.memory_space<vmem>>, vector<64x128xf32>
      %16 = vector.shape_cast %15 : vector<64x128xf32> to vector<1x64x128xf32>
      %cst_12 = arith.constant dense<0.000000e+00> : vector<1xf32>
      %17 = vector.multi_reduction <add>, %16, %cst_12 [1, 2] : vector<1x64x128xf32> to vector<1xf32>
      %18 = vector.shape_cast %17 : vector<1xf32> to vector<1x1x1xf32>
      %19 = vector.extract %18[0, 0, 0] : f32 from vector<1x1x1xf32>
      %c0_13 = arith.constant 0 : index
      %c0_14 = arith.constant 0 : index
      %20 = memref.load %arg4[%c0_13, %c0_14] : memref<1x1xf32, #tpu.memory_space<smem>>
      memref.store %19, %arg4[%c0_13, %c0_14] : memref<1x1xf32, #tpu.memory_space<smem>>
    } else {
    }
    return
  }
  func.func @transform_0(%arg0: i32, %arg1: i32) -> (i32, i32) {
    %c1_i32 = arith.constant 1 : i32
    %0 = arith.muli %arg0, %c1_i32 : i32
    %c0_i32 = arith.constant 0 : i32
    %1 = arith.subi %c0_i32, %0 : i32
    %c0_i32_0 = arith.constant 0 : i32
    %2 = arith.minsi %c0_i32_0, %1 : i32
    %c1_i32_1 = arith.constant 1 : i32
    %3 = arith.muli %arg0, %c1_i32_1 : i32
    %4 = arith.minsi %arg1, %2 : i32
    %5 = arith.addi %3, %4 : i32
    %c0_i32_2 = arith.constant 0 : i32
    %c0_i32_3 = arith.constant 0 : i32
    return %5, %c0_i32_2 : i32, i32
  }
  func.func @transform_1(%arg0: i32, %arg1: i32) -> (i32, i32) {
    %c1_i32 = arith.constant 1 : i32
    %0 = arith.muli %arg0, %c1_i32 : i32
    %c0_i32 = arith.constant 0 : i32
    %1 = arith.subi %c0_i32, %0 : i32
    %c0_i32_0 = arith.constant 0 : i32
    %2 = arith.minsi %c0_i32_0, %1 : i32
    %c1_i32_1 = arith.constant 1 : i32
    %3 = arith.muli %arg0, %c1_i32_1 : i32
    %4 = arith.minsi %arg1, %2 : i32
    %5 = arith.addi %3, %4 : i32
    %c0_i32_2 = arith.constant 0 : i32
    %c0_i32_3 = arith.constant 0 : i32
    return %5, %c0_i32_2 : i32, i32
  }
  func.func @transform_2(%arg0: i32, %arg1: i32) -> (i32, i32) {
    %c0_i32 = arith.constant 0 : i32
    %c0_i32_0 = arith.constant 0 : i32
    return %arg0, %c0_i32 : i32, i32
  }
}

</mosaic_0001>

<llo_original>
// kernel: tpu_custom_call.1
$region0: #{tpu_custom_call.1}
  #allocation0 [shape = 'u32[]', space=smem, size = 0x4, offset = 0x4, fixed_abs, tag = 'smem constant byte address 0x4 - core index']
  #allocation1 [shape = 'u32[144,128]{1,0:T(1,128)}', space=vmem, size = 0x12000, scoped, tag = 'internal scratch']
  #allocation2 [shape = 'f32[64,128]{1,0:T(8,128)}', space=vmem, size = 0x8000, scoped, tag = 'scratch operand']
  %s0 = inlined_call_operand.hbm [shape: f32[16,128], index: 0, kind: input, shape index: {}]
  %s1 = inlined_call_operand.hbm [shape: f32[16,128], index: 1, kind: input, shape index: {}]
  %s2 = inlined_call_operand.hbm [shape: f32[1,1], index: 2, kind: output, shape index: {}]
  %s3 = sld [smem:[#allocation0]]
  $region34: #{tpu_custom_call.1} parent=0
    _
  %s5 = ssub.s32 1, %s3
  %s6 = scalar_select 0, %s5, %s3
  $region1: #{tpu_custom_call.1} parent=0
    #allocation3 [shape = 'u8[8192]{0}', space=vmem, size = 0x2000, scoped, tag = 'input window, operand 0, single buffered']
    #allocation4 [shape = 's32[1]{0}', space=sflag, size = 0x4, scoped, tag = 'scoped memory for tpu_custom_call.1']
    #allocation5 [shape = 's32[1]{0}', space=sflag, size = 0x4, scoped, tag = 'scoped memory for tpu_custom_call.1']
    #allocation6 [shape = 'u8[8192]{0}', space=vmem, size = 0x2000, scoped, tag = 'input window, operand 1, single buffered']
    #allocation7 [shape = 's32[1]{0}', space=sflag, size = 0x4, scoped, tag = 'scoped memory for tpu_custom_call.1']
    #allocation8 [shape = 'u8[512]{0}', space=smem, size = 0x200, scoped, tag = 'output window, operand 0, single buffered']
    %7 = vsyncpa [#allocation4], 0
    %8 = vsyncpa [#allocation7], 0
    %9 = vsyncpa [#allocation5], 0
    // Predicated region
    $region2: #{tpu_custom_call.1} parent=1 // pred_check
      _
    $region3: #{tpu_custom_call.1} parent=1 // pred_check_branch
      %11 = sbr.rel (0) target = $region5
    $region4: #{tpu_custom_call.1} parent=1 // pred_region
      %s12 = ssub.s32 0, 0
      %p13 = scmp.lt.s32.totalorder %s12, 0
      %s14 = scalar_select %p13, %s12, 0
      %p15 = scmp.lt.s32.totalorder 0, %s14
      %s16 = scalar_select %p15, 0, %s14
      %s17 = sadd.s32 0, %s16
      %s18 = smul.u32 2, %s17
      %s20 = ssub.s32 256, 256
      %21 = vsyncadd [#allocation4], %s20
      %s22 = smul.addr %s18, 128
      %s23 = scalar_lea.hbm %s0, %s22
      %s24 = sshll.u32 [#allocation3], 4
      %s25 = int_to_ptr.vmem [resolvable:$true] %s24
      %30 = dma.hbm_to_vmem [thread:$0]  %s23, 256, %s25, [#allocation4], 128, 128, 8
    $region5: #{tpu_custom_call.1} parent=1 // pred_fallthru
      _
    // Predicated region
    $region6: #{tpu_custom_call.1} parent=1 // pred_check
      _
    $region7: #{tpu_custom_call.1} parent=1 // pred_check_branch
      %32 = sbr.rel (0) target = $region9
    $region8: #{tpu_custom_call.1} parent=1 // pred_region
      %s33 = ssub.s32 0, 0
      %p34 = scmp.lt.s32.totalorder %s33, 0
      %s35 = scalar_select %p34, %s33, 0
      %p36 = scmp.lt.s32.totalorder 0, %s35
      %s37 = scalar_select %p36, 0, %s35
      %s38 = sadd.s32 0, %s37
      %s39 = smul.u32 2, %s38
      %s41 = ssub.s32 256, 256
      %42 = vsyncadd [#allocation7], %s41
      %s43 = smul.addr %s39, 128
      %s44 = scalar_lea.hbm %s1, %s43
      %s45 = sshll.u32 [#allocation6], 4
      %s46 = int_to_ptr.vmem [resolvable:$true] %s45
      %51 = dma.hbm_to_vmem [thread:$0]  %s44, 256, %s46, [#allocation7], 128, 128, 8
    $region9: #{tpu_custom_call.1} parent=1 // pred_fallthru
      _
    // Predicated region
    $region10: #{tpu_custom_call.1} parent=1 // pred_check
      _
    $region11: #{tpu_custom_call.1} parent=1 // pred_check_branch
      %53 = sbr.rel (0) target = $region13
    $region12: #{tpu_custom_call.1} parent=1 // pred_region
      %54 = dma.done [#allocation4], 256
    $region13: #{tpu_custom_call.1} parent=1 // pred_fallthru
      _
    // Predicated region
    $region14: #{tpu_custom_call.1} parent=1 // pred_check
      _
    $region15: #{tpu_custom_call.1} parent=1 // pred_check_branch
      %56 = sbr.rel (0) target = $region17
    $region16: #{tpu_custom_call.1} parent=1 // pred_region
      %57 = dma.done [#allocation7], 256
    $region17: #{tpu_custom_call.1} parent=1 // pred_fallthru
      _
    %s58 = ssub.s32 0, 0
    %p59 = scmp.lt.s32.totalorder %s58, 0
    %s60 = scalar_select %p59, %s58, 0
    %p61 = scmp.lt.s32.totalorder 0, %s60
    %s62 = scalar_select %p61, 0, %s60
    %s63 = sadd.s32 0, %s62
    %s64 = smul.u32 2, %s63
    %s65 = ssub.s32 0, 0
    %p66 = scmp.lt.s32.totalorder %s65, 0
    %s67 = scalar_select %p66, %s65, 0
    %p68 = scmp.lt.s32.totalorder 0, %s67
    %s69 = scalar_select %p68, 0, %s67
    %s70 = sadd.s32 0, %s69
    %s71 = smul.u32 2, %s70
    %p72 = scmp.eq.s32.totalorder 0, 0
    // Predicated region
    $region18: #{tpu_custom_call.1} parent=1 // pred_check
      %p73 = pneg %p72
    $region19: #{tpu_custom_call.1} parent=1 // pred_check_branch
      %75 = sbr.rel (%p73) target = $region21
    $region20: #{tpu_custom_call.1} parent=1 // pred_region
      %76 = vst [vmem:[#allocation2] sm:$0xff] 0.0
      %77 = vst [vmem:[#allocation2 + $0x8] sm:$0xff] 0.0
      %78 = vst [vmem:[#allocation2 + $0x10] sm:$0xff] 0.0
      %79 = vst [vmem:[#allocation2 + $0x18] sm:$0xff] 0.0
      %80 = vst [vmem:[#allocation2 + $0x20] sm:$0xff] 0.0
      %81 = vst [vmem:[#allocation2 + $0x28] sm:$0xff] 0.0
      %82 = vst [vmem:[#allocation2 + $0x30] sm:$0xff] 0.0
      %83 = vst [vmem:[#allocation2 + $0x38] sm:$0xff] 0.0
    $region21: #{tpu_custom_call.1} parent=1 // pred_fallthru
      _
    %v84 = vld [vmem:[#allocation3] sm:$0xff]
    %v85 = vld [vmem:[#allocation3 + $0x8] sm:$0xff]
    %v86 = vld [vmem:[#allocation6] sm:$0xff]
    %v87 = vld [vmem:[#allocation6 + $0x8] sm:$0xff]
    %v88 = vsub.f32 %v84, %v86
    %v89 = vsub.f32 %v85, %v87
    %v90 = vmul.f32 %v88, %v88
    %v91 = vmul.f32 %v89, %v89
    %v92 = vld [vmem:[#allocation2] sm:$0xff]
    %v93 = vadd.f32 %v90, %v91
    %v94 = vadd.f32 %v92, %v93
    %95 = vst [vmem:[#allocation2] sm:$0xff] %v94
    // Predicated region
    $region22: #{tpu_custom_call.1} parent=1 // pred_check
      %p96 = pneg %p72
    $region23: #{tpu_custom_call.1} parent=1 // pred_check_branch
      %98 = sbr.rel (%p96) target = $region25
    $region24: #{tpu_custom_call.1} parent=1 // pred_region
      %v99 = vld [vmem:[#allocation2] sm:$0xff]
      %v100 = vld [vmem:[#allocation2 + $0x8] sm:$0xff]
      %v101 = vld [vmem:[#allocation2 + $0x10] sm:$0xff]
      %v102 = vld [vmem:[#allocation2 + $0x18] sm:$0xff]
      %v103 = vld [vmem:[#allocation2 + $0x20] sm:$0xff]
      %v104 = vld [vmem:[#allocation2 + $0x28] sm:$0xff]
      %v105 = vld [vmem:[#allocation2 + $0x30] sm:$0xff]
      %v106 = vld [vmem:[#allocation2 + $0x38] sm:$0xff]
      %v107 = vadd.f32 %v99, %v100
      %v108 = vadd.f32 %v107, %v101
      %v109 = vadd.f32 %v108, %v102
      %v110 = vadd.f32 %v109, %v103
      %v111 = vadd.f32 %v110, %v104
      %v112 = vadd.f32 %v111, %v105
      %v113 = vadd.f32 %v112, %v106
      %114 = vadd.xlane.f32.xlu0 %v113
      %v115 = vpop.xlane.xlu0 %114
      %v116 = vrot.slane %v115, 4
      %v117 = vadd.f32 %v115, %v116
      %v118 = vrot.slane %v117, 2
      %v119 = vadd.f32 %v117, %v118
      %v120 = vrot.slane %v119, 1
      %v121 = vadd.f32 %v119, %v120
      %s122 = vtos %v121
      %s123 = scalar_lea.smem [#allocation8], 0
      %124 = sst [smem:[%s123]] %s122
    $region25: #{tpu_custom_call.1} parent=1 // pred_fallthru
      _
    // Predicated region
    $region26: #{tpu_custom_call.1} parent=1 // pred_check
      _
    $region27: #{tpu_custom_call.1} parent=1 // pred_check_branch
      %126 = sbr.rel (0) target = $region29
    $region28: #{tpu_custom_call.1} parent=1 // pred_region
      %s128 = ssub.s32 16, 16
      %129 = vsyncadd [#allocation5], %s128
      %132 = dma.smem_to_hbm [#allocation8], 16, %s2, [#allocation5]
    $region29: #{tpu_custom_call.1} parent=1 // pred_fallthru
      _
    // Predicated region
    $region30: #{tpu_custom_call.1} parent=1 // pred_check
      _
    $region31: #{tpu_custom_call.1} parent=1 // pred_check_branch
      %134 = sbr.rel (0) target = $region33
    $region32: #{tpu_custom_call.1} parent=1 // pred_region
      %135 = dma.done [#allocation5], 16
    $region33: #{tpu_custom_call.1} parent=1 // pred_fallthru
      _
    %136 = sfence
    %137 = vsyncpa [#allocation4], 1
    %138 = vsyncpa [#allocation7], 1
    %139 = vsyncpa [#allocation5], 1

</llo_original>
